<compile_context>
chip_gen: v7x
topology: tpu7x:2x2x1
jax: 0.10.0
libtpu: 0.0.40
codegen_flags: <defaults>
</compile_context>

<pallas_src>
import jax
import jax.numpy as jnp
from jax import lax
from jax.experimental import pallas as pl
from jax.experimental.pallas import tpu as pltpu


VMEM_LIMIT_BYTES = 48 * 1024 * 1024   # explicit budget, fits v7x's 64 MiB VMEM


def _row_tile(h, requested):
    """Largest divisor of h that is <= requested (keeps the grid exact)."""
    t = max(1, min(requested, h))
    while h % t:
        t -= 1
    return t


# --------------------------------------------------------------------------- #
# ConvTranspose2d(kernel=2, stride=2): per-tile MXU matmul, scatter fused out. #
# --------------------------------------------------------------------------- #
def _upsample_kernel(x_ref, w_ref, b_ref, o_ref):
    # x: (th, W, Cd)   w: (Cd, 2, 2*Co)   b: (1, 2*Co)   o: (th, 2, W, 2*Co)
    th, wdim, cd = x_ref.shape
    two_co = w_ref.shape[-1]
    xf = x_ref[...].reshape(th * wdim, cd)
    wall = w_ref[...]
    bias = b_ref[...]
    ys = []
    for a in range(2):   # output-row parity: two K=Cd dots, no transpose needed
        ya = jnp.dot(xf, wall[:, a, :], preferred_element_type=jnp.float32) + bias
        ys.append(ya.reshape(th, 1, wdim, two_co))       # minor dim preserved
    o_ref[...] = jnp.concatenate(ys, axis=1)             # (th, 2, W, 2*Co)


def conv_transpose_2x2_s2(x, w_up, b_up, *, row_tile=None):
    # x: (N, H, W, Cd), w_up: (Cd, 2, 2, Co), b_up: (Co,)
    n, h, w, cd = x.shape
    co = w_up.shape[-1]
    th = _row_tile(h, row_tile or h)
    nb = h // th
    w2 = w_up.reshape(cd, 2, 2 * co)                     # [ci, a, (b, co)]
    b2 = jnp.tile(b_up, 2).reshape(1, 2 * co)            # [(b, co)]
    out = pl.pallas_call(
        _upsample_kernel,
        out_shape=jax.ShapeDtypeStruct((n, h, 2, w, 2 * co), jnp.float32),
        grid=(n, nb),
        in_specs=[
            pl.BlockSpec((None, th, w, cd), lambda i, r: (i, r, 0, 0)),
            pl.BlockSpec((cd, 2, 2 * co), lambda i, r: (0, 0, 0)),
            pl.BlockSpec((1, 2 * co), lambda i, r: (0, 0)),
        ],
        out_specs=pl.BlockSpec((None, th, 2, w, 2 * co),
                               lambda i, r: (i, r, 0, 0, 0)),
        compiler_params=pltpu.CompilerParams(
            dimension_semantics=("parallel", "arbitrary"),
            vmem_limit_bytes=VMEM_LIMIT_BYTES),
    )(x, w2, b2)
    # (N, H, 2, W, 2*Co) -> (N, 2H, 2W, Co): linear-order-preserving => free.
    return out.reshape(n, 2 * h, 2 * w, co)


# --------------------------------------------------------------------------- #
# Conv2d(3x3, pad=1, bias folded out) + BatchNorm2d(training) + ReLU, tiled.   #
# --------------------------------------------------------------------------- #
def _make_conv_stats_kernel(n_streams, th, w, co):
    def kernel(*refs):
        x_refs = refs[:n_streams]
        w_refs = refs[n_streams:2 * n_streams]
        z_ref, stats_ref = refs[2 * n_streams], refs[2 * n_streams + 1]
        acc = jnp.zeros((th * w, co), jnp.float32)
        for x_ref, w_ref in zip(x_refs, w_refs):
            x = x_ref[...]                                # (th+2, W+2, Cin)
            cin = x.shape[-1]
            # in-VMEM im2col: 9 static shifted slices -> (th*W, 9*Cin)
            cols = [x[dy:dy + th, dx:dx + w, :].reshape(th * w, cin)
                    for dy in range(3) for dx in range(3)]
            xc = jnp.concatenate(cols, axis=-1)
            # single fused MXU contraction per stream, K = 9*Cin
            acc = acc + jnp.dot(xc, w_ref[...],
                                preferred_element_type=jnp.float32)
        z_ref[...] = acc.reshape(th, w, co)
        # one-pass per-tile BN partial statistics (sum, sum of squares)
        s1 = jnp.sum(acc, axis=0, keepdims=True)
        s2 = jnp.sum(acc * acc, axis=0, keepdims=True)
        stats_ref[...] = jnp.concatenate([s1, s2], axis=0)   # (2, Co)
    return kernel


def _scale_relu_kernel(z_ref, sc_ref, sh_ref, o_ref):
    # z: (th, W, Co)   sc/sh: (1, Co)
    y = z_ref[...] * sc_ref[...] + sh_ref[...]
    o_ref[...] = jnp.maximum(y, 0.0)


def _halo_row_bands(x, th, nb):
    """(N,H,W,C) -> (N, nb, th+2, W+2, C) zero-padded overlapping row bands."""
    xp = jnp.pad(x, ((0, 0), (1, 1), (1, 1), (0, 0)))
    return jnp.stack([xp[:, r * th:r * th + th + 2] for r in range(nb)], axis=1)


def conv3x3_bn_relu(xs, ws, gamma, beta, *, row_tile=None, eps=1e-5):
    """xs/ws: parallel lists -- the Cin reduction is split across streams so the
    caller never materializes a channel concat in HBM."""
    n, h, w, _ = xs[0].shape
    co = ws[0].shape[-1]
    th = _row_tile(h, row_tile or h)
    nb = h // th

    xbs = [_halo_row_bands(x, th, nb) for x in xs]
    wfs = [wt.reshape(9 * wt.shape[2], co) for wt in ws]   # tap-major, K = 9*Cin
    cins = [x.shape[-1] for x in xs]

    in_specs = (
        [pl.BlockSpec((None, None, th + 2, w + 2, c),
                      lambda i, r: (i, r, 0, 0, 0)) for c in cins]
        + [pl.BlockSpec((9 * c, co), lambda i, r: (0, 0)) for c in cins])

    # Pass 1: conv + per-tile BN partial statistics.
    z, stats = pl.pallas_call(
        _make_conv_stats_kernel(len(xs), th, w, co),
        out_shape=(jax.ShapeDtypeStruct((n, h, w, co), jnp.float32),
                   jax.ShapeDtypeStruct((n, nb, 2, co), jnp.float32)),
        grid=(n, nb),
        in_specs=in_specs,
        out_specs=(pl.BlockSpec((None, th, w, co), lambda i, r: (i, r, 0, 0)),
                   pl.BlockSpec((None, None, 2, co), lambda i, r: (i, r, 0, 0))),
        compiler_params=pltpu.CompilerParams(
            dimension_semantics=("parallel", "arbitrary"),
            vmem_limit_bytes=VMEM_LIMIT_BYTES),
    )(*xbs, *wfs)

    # Global batch statistics (tiny (N, nb, 2, Co) reduction) folded with the
    # BN affine into per-channel scale/shift -- negligible XLA-side work.
    cnt = float(n * h * w)
    tot = jnp.sum(stats, axis=(0, 1))                     # (2, Co)
    mean = tot[0] / cnt
    var = tot[1] / cnt - mean * mean
    scale = gamma * lax.rsqrt(var + eps)
    shift = beta - mean * scale

    # Pass 2: normalize + affine + ReLU (global stats => correct under tiling).
    out = pl.pallas_call(
        _scale_relu_kernel,
        out_shape=jax.ShapeDtypeStruct((n, h, w, co), jnp.float32),
        grid=(n, nb),
        in_specs=[pl.BlockSpec((None, th, w, co), lambda i, r: (i, r, 0, 0)),
                  pl.BlockSpec((1, co), lambda i, r: (0, 0)),
                  pl.BlockSpec((1, co), lambda i, r: (0, 0))],
        out_specs=pl.BlockSpec((None, th, w, co), lambda i, r: (i, r, 0, 0)),
        compiler_params=pltpu.CompilerParams(
            dimension_semantics=("parallel", "arbitrary"),
            vmem_limit_bytes=VMEM_LIMIT_BYTES),
    )(z, scale.reshape(1, co), shift.reshape(1, co))
    return out


# --------------------------------------------------------------------------- #
# UpBlock forward                                                              #
# --------------------------------------------------------------------------- #
def up_block_forward(x1, x2, p, *, up_row_tile=4, conv_row_tile=8):
    # x1: decoder feature (N, H, W, Cd); x2: encoder skip (N, 2H, 2W, Ce)
    x1u = conv_transpose_2x2_s2(x1, p["w_up"], p["b_up"], row_tile=up_row_tile)
    ce = x2.shape[-1]
    # torch.cat([x2, x1], dim=1) replaced by a split-K reduction in-kernel.
    y = conv3x3_bn_relu([x2, x1u],
                        [p["w1"][:, :, :ce, :], p["w1"][:, :, ce:, :]],
                        p["g1"], p["be1"], row_tile=conv_row_tile)
    y = conv3x3_bn_relu([y], [p["w2"]], p["g2"], p["be2"],
                        row_tile=conv_row_tile)
    return y


# ------------------------------ pure-JAX reference ------------------------------
def _reference(x1, x2, p):
    n, h, w, _ = x1.shape
    co = p["w_up"].shape[-1]
    y = jnp.einsum("nijc,cabo->niajbo", x1, p["w_up"]).reshape(n, 2 * h, 2 * w, co)
    y = y + p["b_up"]
    x = jnp.concatenate([x2, y], axis=-1)

    def cbr(x, wt, b, g, be):
        z = lax.conv_general_dilated(x, wt, (1, 1), "SAME",
                                     dimension_numbers=("NHWC", "HWIO", "NHWC")) + b
        mean = jnp.mean(z, axis=(0, 1, 2), keepdims=True)
        var = jnp.mean((z - mean) ** 2, axis=(0, 1, 2), keepdims=True)
        z = (z - mean) * lax.rsqrt(var + 1e-5) * g + be
        return jnp.maximum(z, 0.0)

    x = cbr(x, p["w1"], p["b1"], p["g1"], p["be1"])
    x = cbr(x, p["w2"], p["b2"], p["g2"], p["be2"])
    return x


if __name__ == "__main__":
    # decoder_in=8, encoder_in=4, out=8; decoder 8x8 -> upsampled 16x16.
    N, H, W = 2, 8, 8
    Cd, Ce, Co = 8, 4, 8
    Cin1 = Ce + Co

    key = jax.random.PRNGKey(0)
    ks = jax.random.split(key, 8)
    params = {
        # ConvTranspose2d weight (PyTorch (Cd, Co, 2, 2)) stored as (Cd, 2, 2, Co)
        "w_up": 0.2 * jax.random.normal(ks[0], (Cd, 2, 2, Co), jnp.float32),
        "b_up": 0.1 * jax.random.normal(ks[1], (Co,), jnp.float32),
        "w1": 0.2 * jax.random.normal(ks[2], (3, 3, Cin1, Co), jnp.float32),
        "b1": 0.1 * jax.random.normal(ks[3], (Co,), jnp.float32),  # reference only (cancels under BN)
        "g1": jnp.ones((Co,), jnp.float32),
        "be1": jnp.zeros((Co,), jnp.float32),
        "w2": 0.2 * jax.random.normal(ks[4], (3, 3, Co, Co), jnp.float32),
        "b2": 0.1 * jax.random.normal(ks[5], (Co,), jnp.float32),  # reference only (cancels under BN)
        "g2": jnp.ones((Co,), jnp.float32),
        "be2": jnp.zeros((Co,), jnp.float32),
    }
    x1 = jax.random.normal(ks[6], (N, H, W, Cd), jnp.float32)          # decoder feature
    x2 = jax.random.normal(ks[7], (N, 2 * H, 2 * W, Ce), jnp.float32)  # encoder skip

    out = jax.block_until_ready(up_block_forward(x1, x2, params))
    ref = jax.block_until_ready(_reference(x1, x2, params))

    assert out.shape == (N, 2 * H, 2 * W, Co), out.shape
    err = float(jnp.max(jnp.abs(out - ref)))
    assert jnp.allclose(out, ref, rtol=1e-3, atol=1e-3), err
    print("KERNEL_OK")
</pallas_src>

<mosaic_0001>
module attributes {stable_mosaic.version = 11 : i64} {
  func.func @_upsample_kernel(%arg0: i32, %arg1: i32, %arg2: memref<1x4x8x8xf32, #tpu.memory_space<vmem>>, %arg3: memref<8x2x16xf32, #tpu.memory_space<vmem>>, %arg4: memref<1x16xf32, #tpu.memory_space<vmem>>, %arg5: memref<1x4x2x8x16xf32, #tpu.memory_space<vmem>>) attributes {dimension_semantics = [#tpu.dimension_semantics<parallel>, #tpu.dimension_semantics<arbitrary>], iteration_bounds = array<i64: 2, 2>, scalar_prefetch = 0 : i64, scratch_operands = 0 : i64, tpu.core_type = #tpu.core_type<tc>, window_params = [{transform_indices = @transform_0, window_bounds = array<i64: 1, 4, 8, 8>}, {pipeline_mode = #tpu.pipeline_mode<synchronous>, transform_indices = @transform_1, window_bounds = array<i64: 8, 2, 16>}, {pipeline_mode = #tpu.pipeline_mode<synchronous>, transform_indices = @transform_2, window_bounds = array<i64: 1, 16>}, {transform_indices = @transform_3, window_bounds = array<i64: 1, 4, 2, 8, 16>}]} {
    %c0 = arith.constant 0 : index
    %c0_0 = arith.constant 0 : index
    %c0_1 = arith.constant 0 : index
    %c0_2 = arith.constant 0 : index
    %0 = vector.load %arg2[%c0, %c0_0, %c0_1, %c0_2] : memref<1x4x8x8xf32, #tpu.memory_space<vmem>>, vector<1x4x8x8xf32>
    %1 = vector.shape_cast %0 : vector<1x4x8x8xf32> to vector<4x8x8xf32>
    %2 = vector.shape_cast %1 : vector<4x8x8xf32> to vector<32x8xf32>
    %c0_3 = arith.constant 0 : index
    %c0_4 = arith.constant 0 : index
    %c0_5 = arith.constant 0 : index
    %3 = vector.load %arg3[%c0_3, %c0_4, %c0_5] : memref<8x2x16xf32, #tpu.memory_space<vmem>>, vector<8x2x16xf32>
    %c0_6 = arith.constant 0 : index
    %c0_7 = arith.constant 0 : index
    %4 = vector.load %arg4[%c0_6, %c0_7] : memref<1x16xf32, #tpu.memory_space<vmem>>, vector<1x16xf32>
    %5 = vector.extract_strided_slice %3 {offsets = [0, 0, 0], sizes = [8, 1, 16], strides = [1, 1, 1]} : vector<8x2x16xf32> to vector<8x1x16xf32>
    %6 = vector.shape_cast %5 : vector<8x1x16xf32> to vector<8x16xf32>
    %cst = arith.constant dense<0.000000e+00> : vector<32x16xf32>
    %7 = tpu.matmul %2, %6, %cst {dimension_numbers = #tpu.dot_dimension_numbers<[1], [0], [0], [1], [0, 0, 1, 1], [], []>} : vector<32x8xf32>, vector<8x16xf32>, vector<32x16xf32> -> vector<32x16xf32>
    %8 = vector.broadcast %4 : vector<1x16xf32> to vector<32x16xf32>
    %9 = arith.addf %7, %8 : vector<32x16xf32>
    %10 = vector.shape_cast %9 : vector<32x16xf32> to vector<4x1x8x16xf32>
    %11 = vector.extract_strided_slice %3 {offsets = [0, 1, 0], sizes = [8, 1, 16], strides = [1, 1, 1]} : vector<8x2x16xf32> to vector<8x1x16xf32>
    %12 = vector.shape_cast %11 : vector<8x1x16xf32> to vector<8x16xf32>
    %cst_8 = arith.constant dense<0.000000e+00> : vector<32x16xf32>
    %13 = tpu.matmul %2, %12, %cst_8 {dimension_numbers = #tpu.dot_dimension_numbers<[1], [0], [0], [1], [0, 0, 1, 1], [], []>} : vector<32x8xf32>, vector<8x16xf32>, vector<32x16xf32> -> vector<32x16xf32>
    %14 = vector.broadcast %4 : vector<1x16xf32> to vector<32x16xf32>
    %15 = arith.addf %13, %14 : vector<32x16xf32>
    %16 = vector.shape_cast %15 : vector<32x16xf32> to vector<4x1x8x16xf32>
    %17 = tpu.concatenate %10, %16 in 1 : vector<4x1x8x16xf32>, vector<4x1x8x16xf32> -> vector<4x2x8x16xf32>
    %c0_9 = arith.constant 0 : index
    %c0_10 = arith.constant 0 : index
    %c0_11 = arith.constant 0 : index
    %c0_12 = arith.constant 0 : index
    %c0_13 = arith.constant 0 : index
    %18 = vector.load %arg5[%c0_9, %c0_10, %c0_11, %c0_12, %c0_13] : memref<1x4x2x8x16xf32, #tpu.memory_space<vmem>>, vector<1x4x2x8x16xf32>
    %19 = vector.shape_cast %18 : vector<1x4x2x8x16xf32> to vector<4x2x8x16xf32>
    %20 = vector.shape_cast %17 : vector<4x2x8x16xf32> to vector<1x4x2x8x16xf32>
    tpu.vector_store %arg5[%c0_9, %c0_10, %c0_11, %c0_12, %c0_13], %20 {strides = array<i32>} : memref<1x4x2x8x16xf32, #tpu.memory_space<vmem>>, vector<1x4x2x8x16xf32>,
    return
  }
  func.func @transform_0(%arg0: i32, %arg1: i32) -> (i32, i32, i32, i32) {
    %c0_i32 = arith.constant 0 : i32
    %c0_i32_0 = arith.constant 0 : i32
    %c0_i32_1 = arith.constant 0 : i32
    return %arg0, %arg1, %c0_i32, %c0_i32_0 : i32, i32, i32, i32
  }
  func.func @transform_1(%arg0: i32, %arg1: i32) -> (i32, i32, i32) {
    %c0_i32 = arith.constant 0 : i32
    %c0_i32_0 = arith.constant 0 : i32
    %c0_i32_1 = arith.constant 0 : i32
    %c0_i32_2 = arith.constant 0 : i32
    return %c0_i32, %c0_i32_0, %c0_i32_1 : i32, i32, i32
  }
  func.func @transform_2(%arg0: i32, %arg1: i32) -> (i32, i32) {
    %c0_i32 = arith.constant 0 : i32
    %c0_i32_0 = arith.constant 0 : i32
    %c0_i32_1 = arith.constant 0 : i32
    return %c0_i32, %c0_i32_0 : i32, i32
  }
  func.func @transform_3(%arg0: i32, %arg1: i32) -> (i32, i32, i32, i32, i32) {
    %c0_i32 = arith.constant 0 : i32
    %c0_i32_0 = arith.constant 0 : i32
    %c0_i32_1 = arith.constant 0 : i32
    %c0_i32_2 = arith.constant 0 : i32
    return %arg0, %arg1, %c0_i32, %c0_i32_0, %c0_i32_1 : i32, i32, i32, i32, i32
  }
}

</mosaic_0001>

<llo_original>
// kernel: tpu_custom_call.1
$region0: #{tpu_custom_call.1}
  #allocation0 [shape = 'u32[]', space=smem, size = 0x4, offset = 0x4, fixed_abs, tag = 'smem constant byte address 0x4 - core index']
  #allocation1 [shape = 'u32[144,128]{1,0:T(1,128)}', space=vmem, size = 0x12000, scoped, tag = 'internal scratch']
  %s0 = inlined_call_operand.hbm [shape: f32[2,8,8,8], index: 0, kind: input, shape index: {}]
  %s1 = inlined_call_operand.hbm [shape: f32[8,2,16], index: 1, kind: input, shape index: {}]
  %s2 = inlined_call_operand.vmem [shape: f32[1,16], index: 2, kind: input, shape index: {}]
  %s3 = inlined_call_operand.hbm [shape: f32[2,8,2,8,16], index: 3, kind: output, shape index: {}]
  %s4 = sld [smem:[#allocation0]]
  $region53: #{tpu_custom_call.1} parent=0
    _
  %s6 = ssub.s32 1, %s4
  %s7 = scalar_select 0, %s6, %s4
  $region1: #{tpu_custom_call.1} parent=0
    #allocation2 [shape = 'u8[32768]{0}', space=vmem, size = 0x8000, scoped, tag = 'input window, operand 0']
    #allocation3 [shape = 's32[2]{0}', space=sflag, size = 0x8, scoped, tag = 'scoped memory for tpu_custom_call.1']
    #allocation4 [shape = 's32[2]{0}', space=sflag, size = 0x8, scoped, tag = 'scoped memory for tpu_custom_call.1']
    #allocation5 [shape = 'u8[8192]{0}', space=vmem, size = 0x2000, scoped, tag = 'input window, operand 1, single buffered']
    #allocation6 [shape = 's32[1]{0}', space=sflag, size = 0x4, scoped, tag = 'scoped memory for tpu_custom_call.1']
    #allocation7 [shape = 'u8[65536]{0}', space=vmem, size = 0x10000, scoped, tag = 'output window, operand 0']
    %8 = vsyncpa [#allocation3], 0
    %s9 = scalar_lea.sflag [#allocation3], 1
    %10 = vsyncpa %s9, 0
    %11 = vsyncpa [#allocation6], 0
    %12 = vsyncpa [#allocation4], 0
    %s13 = scalar_lea.sflag [#allocation4], 1
    %14 = vsyncpa %s13, 0
    loop: start=0, step=1, limit=6
    $region2: #{tpu_custom_call.1} parent=1 // loop_pre_header
      _
    $region3: #{tpu_custom_call.1} parent=1 // loop_header
      %s16 = sphi 0, %s20
      %p17 = scmp.ge.s32.totalorder %s16, 6
      %s23 = sphi 0, %s35
      %s24 = sphi 0, %s31
      %s25 = sphi 0, %s23
      %s26 = sphi 0, %s24
      %s27 = sphi 0, %s25
      %s28 = sphi 0, %s26
      %s40 = sphi 0, %s42
      %s43 = sphi 0, %s40
      %s44 = sphi 0, %s43
      %s60 = sphi 0, %s44
      %s64 = sphi 0, %s64
      %s66 = sphi 0, %s64
      %s67 = sphi 0, %s66
      %s81 = sphi 0, %s67
      %s85 = sphi 0, %s85
      %s87 = sphi 0, %s85
      %s88 = sphi 0, %s87
      %s102 = sphi 0, %s88
      %s110 = sphi 0, %s112
      %s113 = sphi 0, %s110
      %s114 = sphi 0, %s113
      %s130 = sphi 0, %s114
    $region4: #{tpu_custom_call.1} parent=1 // loop_header_branch
      %19 = sbr.rel (%p17) target = $region8
    $region5: #{tpu_custom_call.1} parent=1 // loop_body
      %s21 = ssub.s32 %s16, 1
      %s22 = ssub.s32 %s16, 2
      %s29 = sadd.s32 1, %s24
      %p30 = scmp.ge.s32.totalorder %s29, 2
      %s31 = scalar_select %p30, 0, %s29
      %s32 = sadd.s32 1, %s23
      %s33 = scalar_select %p30, %s32, %s23
      %p34 = scmp.ge.s32.totalorder %s33, 2
      %s35 = scalar_select %p34, 0, %s33
      %s36 = ssub.s32 %s23, %s35
      %s37 = ssub.s32 %s24, %s31
      %s38 = sor.u32 %s36, %s37
      %p39 = scmp.eq.s32.totalorder %s38, 0
      %s41 = sadd.s32 %s40, 1
      %s42 = scalar_select %p39, %s40, %s41
      %p45 = pneg %p39
      %p46 = scmp.eq.s32.totalorder %s16, 3
      %p47 = por %p45, %p46
      %p48 = scmp.ne.s32.totalorder %s40, %s43
      %p49 = scmp.eq.s32.totalorder %s16, 0
      %p50 = por %p48, %p49
      %p51 = scmp.ne.s32.totalorder %s40, %s43
      %p52 = scmp.eq.s32.totalorder %s21, 3
      %p53 = por %p51, %p52
      %p54 = scmp.ne.s32.totalorder %s43, %s44
      %p55 = scmp.eq.s32.totalorder %s21, 0
      %p56 = por %p54, %p55
      %p57 = scmp.ne.s32.totalorder %s43, %s44
      %p58 = scmp.eq.s32.totalorder %s22, 3
      %p59 = por %p57, %p58
      %p61 = scmp.ne.s32.totalorder %s44, %s60
      %p62 = scmp.eq.s32.totalorder %s22, 0
      %p63 = por %p61, %p62
      %s65 = sadd.s32 %s64, 1
      %p68 = scmp.eq.s32.totalorder %s16, 3
      %p69 = scmp.ne.s32.totalorder %s64, %s66
      %p70 = scmp.eq.s32.totalorder %s16, 0
      %p71 = por %p69, %p70
      %p72 = scmp.ne.s32.totalorder %s64, %s66
      %p73 = scmp.eq.s32.totalorder %s21, 3
      %p74 = por %p72, %p73
      %p75 = scmp.ne.s32.totalorder %s66, %s67
      %p76 = scmp.eq.s32.totalorder %s21, 0
      %p77 = por %p75, %p76
      %p78 = scmp.ne.s32.totalorder %s66, %s67
      %p79 = scmp.eq.s32.totalorder %s22, 3
      %p80 = por %p78, %p79
      %p82 = scmp.ne.s32.totalorder %s67, %s81
      %p83 = scmp.eq.s32.totalorder %s22, 0
      %p84 = por %p82, %p83
      %s86 = sadd.s32 %s85, 1
      %p89 = scmp.eq.s32.totalorder %s16, 3
      %p90 = scmp.ne.s32.totalorder %s85, %s87
      %p91 = scmp.eq.s32.totalorder %s16, 0
      %p92 = por %p90, %p91
      %p93 = scmp.ne.s32.totalorder %s85, %s87
      %p94 = scmp.eq.s32.totalorder %s21, 3
      %p95 = por %p93, %p94
      %p96 = scmp.ne.s32.totalorder %s87, %s88
      %p97 = scmp.eq.s32.totalorder %s21, 0
      %p98 = por %p96, %p97
      %p99 = scmp.ne.s32.totalorder %s87, %s88
      %p100 = scmp.eq.s32.totalorder %s22, 3
      %p101 = por %p99, %p100
      %p103 = scmp.ne.s32.totalorder %s88, %s102
      %p104 = scmp.eq.s32.totalorder %s22, 0
      %p105 = por %p103, %p104
      %s106 = ssub.s32 %s23, %s35
      %s107 = ssub.s32 %s24, %s31
      %s108 = sor.u32 %s106, %s107
      %p109 = scmp.eq.s32.totalorder %s108, 0
      %s111 = sadd.s32 %s110, 1
      %s112 = scalar_select %p109, %s110, %s111
      %p115 = pneg %p109
      %p116 = scmp.eq.s32.totalorder %s16, 3
      %p117 = por %p115, %p116
      %p118 = scmp.ne.s32.totalorder %s110, %s113
      %p119 = scmp.eq.s32.totalorder %s16, 0
      %p120 = por %p118, %p119
      %p121 = scmp.ne.s32.totalorder %s110, %s113
      %p122 = scmp.eq.s32.totalorder %s21, 3
      %p123 = por %p121, %p122
      %p124 = scmp.ne.s32.totalorder %s113, %s114
      %p125 = scmp.eq.s32.totalorder %s21, 0
      %p126 = por %p124, %p125
      %p127 = scmp.ne.s32.totalorder %s113, %s114
      %p128 = scmp.eq.s32.totalorder %s22, 3
      %p129 = por %p127, %p128
      %p131 = scmp.ne.s32.totalorder %s114, %s130
      %p132 = scmp.eq.s32.totalorder %s22, 0
      %p133 = por %p131, %p132
      %p134 = scmp.le.s32.totalorder 1, %s16
      %p135 = scmp.lt.s32.totalorder %s16, 5
      %p136 = pnand %p134, %p135
      %p137 = pneg %p136
      // Predicated region
      $region9: #{tpu_custom_call.1} parent=5 // pred_check
        _
      $region10: #{tpu_custom_call.1} parent=5 // pred_check_branch
        %139 = sbr.rel (%p136) target = $region12
      $region11: #{tpu_custom_call.1} parent=5 // pred_region
        %s140 = ssub.s32 %s16, 1
        // Predicated region
        $region13: #{tpu_custom_call.1} parent=11 // pred_check
          %p141 = pneg %p77
        $region14: #{tpu_custom_call.1} parent=11 // pred_check_branch
          %143 = sbr.rel (%p141) target = $region16
        $region15: #{tpu_custom_call.1} parent=11 // pred_region
          %s145 = ssub.s32 256, 256
          %146 = vsyncadd [#allocation6], %s145
          %s147 = sshll.u32 [#allocation5], 4
          %s148 = int_to_ptr.vmem [resolvable:$true] %s147
          %153 = dma.hbm_to_vmem [thread:$0]  %s1, 256, %s148, [#allocation6], 32, 32, 2
        $region16: #{tpu_custom_call.1} parent=11 // pred_fallthru
          _
        // Predicated region
        $region17: #{tpu_custom_call.1} parent=11 // pred_check
          %p154 = pneg %p98
        $region18: #{tpu_custom_call.1} parent=11 // pred_check_branch
          %156 = sbr.rel (%p154) target = $region20
        $region19: #{tpu_custom_call.1} parent=11 // pred_region
          _
        $region20: #{tpu_custom_call.1} parent=11 // pred_fallthru
          _
      $region12: #{tpu_custom_call.1} parent=5 // pred_fallthru
        _
      %p157 = scmp.lt.s32.totalorder %s16, 4
      // Predicated region
      $region21: #{tpu_custom_call.1} parent=5 // pred_check
        %p158 = pneg %p157
      $region22: #{tpu_custom_call.1} parent=5 // pred_check_branch
        %160 = sbr.rel (%p158) target = $region24
      $region23: #{tpu_custom_call.1} parent=5 // pred_region
        // Predicated region
        $region25: #{tpu_custom_call.1} parent=23 // pred_check
          %p161 = pneg %p50
        $region26: #{tpu_custom_call.1} parent=23 // pred_check_branch
          %163 = sbr.rel (%p161) target = $region28
        $region27: #{tpu_custom_call.1} parent=23 // pred_region
          %s164 = sand.u32 %s40, 1
          %s165 = scalar_lea.sflag [#allocation3], %s164
          %s166 = sand.u32 %s40, 1
          %s167 = smul.addr %s166, 32
          %s168 = scalar_lea.vmem [#allocation2], %s167
          %s169 = smul.u32 4, %s24
          %s171 = ssub.s32 512, 512
          %172 = vsyncadd %s165, %s171
          %s173 = smul.addr %s23, 8
          %s174 = sadd.s32 %s169, %s173
          %s175 = smul.addr %s174, 128
          %s176 = scalar_lea.hbm %s0, %s175
          %s177 = sshll.u32 %s168, 4
          %s178 = int_to_ptr.vmem [resolvable:$true] %s177
          %183 = dma.hbm_to_vmem [thread:$0]  %s176, 512, %s178, %s165, 128, 128, 8
        $region28: #{tpu_custom_call.1} parent=23 // pred_fallthru
          _
      $region24: #{tpu_custom_call.1} parent=5 // pred_fallthru
        _
      %p184 = scmp.le.s32.totalorder 1, %s16
      %p185 = scmp.lt.s32.totalorder %s16, 5
      %p186 = pnand %p184, %p185
      %p187 = pneg %p186
      // Predicated region
      $region29: #{tpu_custom_call.1} parent=5 // pred_check
        _
      $region30: #{tpu_custom_call.1} parent=5 // pred_check_branch
        %189 = sbr.rel (%p186) target = $region32
      $region31: #{tpu_custom_call.1} parent=5 // pred_region
        %s190 = ssub.s32 %s16, 1
        %s191 = sand.u32 %s43, 1
        %s192 = scalar_lea.sflag [#allocation3], %s191
        %s193 = sand.u32 %s43, 1
        %s194 = smul.addr %s193, 32
        %s195 = scalar_lea.vmem [#allocation2], %s194
        // Predicated region
        $region33: #{tpu_custom_call.1} parent=31 // pred_check
          %p196 = pneg %p56
        $region34: #{tpu_custom_call.1} parent=31 // pred_check_branch
          %198 = sbr.rel (%p196) target = $region36
        $region35: #{tpu_custom_call.1} parent=31 // pred_region
          %199 = dma.done %s192, 512
        $region36: #{tpu_custom_call.1} parent=31 // pred_fallthru
          _
        // Predicated region
        $region37: #{tpu_custom_call.1} parent=31 // pred_check
          %p200 = pneg %p77
        $region38: #{tpu_custom_call.1} parent=31 // pred_check_branch
          %202 = sbr.rel (%p200) target = $region40
        $region39: #{tpu_custom_call.1} parent=31 // pred_region
          %203 = dma.done [#allocation6], 256
        $region40: #{tpu_custom_call.1} parent=31 // pred_fallthru
          _
        %s204 = sand.u32 %s43, 1
        %s205 = scalar_lea.sflag [#allocation3], %s204
        %s206 = sand.u32 %s43, 1
        %s207 = smul.addr %s206, 32
        %s208 = scalar_lea.vmem [#allocation2], %s207
        %p209 = pneg %p56
        %p210 = pneg %p53
        %p211 = pneg %p77
        %p212 = pneg %p74
        %p213 = pneg %p98
        %p214 = pneg %p95
        %p215 = pneg %p126
        %p216 = pneg %p123
        %s217 = sand.u32 %s113, 1
        %s218 = scalar_lea.sflag [#allocation4], %s217
        %s219 = sand.u32 %s113, 1
        %s220 = smul.addr %s219, 64
        %s221 = scalar_lea.vmem [#allocation7], %s220
        %s222 = smul.u32 4, %s26
        %s223 = smul.u32 4, %s26
        %v224 = vld [vmem:[%s195] sm:$0xff]
        %v225 = vld [vmem:[%s195 + $0x8] sm:$0xff]
        %v226 = vld [vmem:[%s195 + $0x10] sm:$0xff]
        %v227 = vld [vmem:[%s195 + $0x18] sm:$0xff]
        %v228 = vld [vmem:[#allocation5] sm:$0x3]
        %v229 = vld [vmem:[#allocation5 + $0x2] sm:$0x3]
        %v230 = vld [vmem:[#allocation5 + $0x4] sm:$0x3]
        %v231 = vld [vmem:[#allocation5 + $0x6] sm:$0x3]
        %v232 = vld [vmem:[#allocation5 + $0x8] sm:$0x3]
        %v233 = vld [vmem:[#allocation5 + $0xa] sm:$0x3]
        %v234 = vld [vmem:[#allocation5 + $0xc] sm:$0x3]
        %v235 = vld [vmem:[#allocation5 + $0xe] sm:$0x3]
        %v236 = vld [vmem:[%s2] sm:$0x1]
        %v238 = vlaneseq
        %v239 = vshrl.u32 %v238, 7
        %v240 = vsub.s32 0, %v239
        %v241 = vrot.slane %v236, %v240
        %v251 = vrot.slane %v229, 7
        %vm252 = vcmask 1041409
        %v253 = vsel %vm252, %v251, %v228
        %v254 = vrot.slane %v230, 6
        %vm255 = vcmask 1042434
        %v256 = vsel %vm255, %v254, %v253
        %v257 = vrot.slane %v231, 5
        %vm258 = vcmask 1043459
        %v259 = vsel %vm258, %v257, %v256
        %v260 = vrot.slane %v232, 4
        %vm261 = vcmask 1044484
        %v262 = vsel %vm261, %v260, %v259
        %v263 = vrot.slane %v233, 3
        %vm264 = vcmask 1045509
        %v265 = vsel %vm264, %v263, %v262
        %v266 = vrot.slane %v234, 2
        %vm267 = vcmask 1046534
        %v268 = vsel %vm267, %v266, %v265
        %v269 = vrot.slane %v235, 1
        %vm270 = vcmask 1047559
        %v271 = vsel %vm270, %v269, %v268
        %vm273 = vcmask 64512
        %v275 = vsel %vm273, %v224, 0
        %v278 = vsel %vm273, %v225, 0
        %v281 = vsel %vm273, %v226, 0
        %v284 = vsel %vm273, %v227, 0
        %286 = vmatprep.subr.mxu0 0.0
        %287 = vmatpush1.msra.mxu0 %v271
        %288 = vmatprep.subr.mxu0 0.0
        %289 = vmatpush1.msra.mxu0 0.0
        %290 = vmatprep.subr.mxu0 0.0
        %291 = vmatpush1.msra.mxu0 0.0
        %292 = vmatprep.subr.mxu0 0.0
        %293 = vmatpush1.msra.mxu0 0.0
        %294 = vmatprep.subr.mxu0 0.0
        %295 = vmatpush1.msra.mxu0 0.0
        %296 = vmatprep.subr.mxu0 0.0
        %297 = vmatpush1.msra.mxu0 0.0
        %298 = vmatprep.subr.mxu0 0.0
        %299 = vmatpush1.msra.mxu0 0.0
        %300 = vmatprep.subr.mxu0 0.0
        %301 = vmatpush1.msra.mxu0 0.0
        %302 = vmatprep.subr.mxu0 0.0
        %303 = vmatpush1.msra.mxu0 0.0
        %304 = vmatprep.subr.mxu0 0.0
        %305 = vmatpush1.msra.mxu0 0.0
        %306 = vmatprep.subr.mxu0 0.0
        %307 = vmatpush1.msra.mxu0 0.0
        %308 = vmatprep.subr.mxu0 0.0
        %309 = vmatpush1.msra.mxu0 0.0
        %310 = vmatprep.subr.mxu0 0.0
        %311 = vmatpush1.msra.mxu0 0.0
        %312 = vmatprep.subr.mxu0 0.0
        %313 = vmatpush1.msra.mxu0 0.0
        %314 = vmatprep.subr.mxu0 0.0
        %315 = vmatpush1.msra.mxu0 0.0
        %316 = vmatprep.subr.mxu0 0.0
        %317 = vmatpush1.msra.mxu0 0.0
        %318 = vmatprep.subr.mxu0 0.0
        %319 = vmatpush1.msra.mxu0 0.0
        %320 = vmatprep.subr.mxu0 0.0
        %321 = vmatpush1.msra.mxu0 0.0
        %322 = vmatprep.subr.mxu0 0.0
        %323 = vmatpush1.msra.mxu0 0.0
        %324 = vmatprep.subr.mxu0 0.0
        %325 = vmatpush1.msra.mxu0 0.0
        %326 = vmatprep.subr.mxu0 0.0
        %327 = vmatpush1.msra.mxu0 0.0
        %328 = vmatprep.subr.mxu0 0.0
        %329 = vmatpush1.msra.mxu0 0.0
        %330 = vmatprep.subr.mxu0 0.0
        %331 = vmatpush1.msra.mxu0 0.0
        %332 = vmatprep.subr.mxu0 0.0
        %333 = vmatpush1.msra.mxu0 0.0
        %334 = vmatprep.subr.mxu0 0.0
        %335 = vmatpush1.msra.mxu0 0.0
        %336 = vmatprep.subr.mxu0 0.0
        %337 = vmatpush1.msra.mxu0 0.0
        %338 = vmatprep.subr.mxu0 0.0
        %339 = vmatpush1.msra.mxu0 0.0
        %340 = vmatprep.subr.mxu0 0.0
        %341 = vmatpush1.msra.mxu0 0.0
        %342 = vmatprep.subr.mxu0 0.0
        %343 = vmatpush1.msra.mxu0 0.0
        %344 = vmatprep.subr.mxu0 0.0
        %345 = vmatpush1.msra.mxu0 0.0
        %346 = vmatprep.subr.mxu0 0.0
        %347 = vmatpush1.msra.mxu0 0.0
        %348 = vmatprep.subr.mxu0 0.0
        %349 = vmatpush1.msra.mxu0 0.0
        %350 = vmatprep.mubr.f32.mxu0 0.0
        %351 = vmatmul.mubr.f32.gmra.mrb[0].mxu0 %v275
        %v352 = vpop.f32.mrb[0].mxu0
        %v353 = vadd.f32 %v241, %v352
        %v354 = vpop.f32.mrb[0].mxu0
        %355 = vmatprep.mubr.f32.mxu0 0.0
        %356 = vmatmul.mubr.f32.gmra.mrb[0].mxu0 %v278
        %v357 = vpop.f32.mrb[0].mxu0
        %v358 = vadd.f32 %v241, %v357
        %v359 = vpop.f32.mrb[0].mxu0
        %360 = vmatprep.mubr.f32.mxu0 0.0
        %361 = vmatmul.mubr.f32.gmra.mrb[0].mxu0 %v281
        %v362 = vpop.f32.mrb[0].mxu0
        %v363 = vadd.f32 %v241, %v362
        %v364 = vpop.f32.mrb[0].mxu0
        %365 = vmatprep.mubr.f32.mxu0 0.0
        %366 = vmatmul.mubr.f32.gmra.mrb[0].mxu0 %v284
        %v367 = vpop.f32.mrb[0].mxu0
        %v368 = vadd.f32 %v241, %v367
        %v369 = vpop.f32.mrb[0].mxu0
        %370 = vdwg.mxu0
        %v371 = vrot.slane %v228, 1
        %v372 = vsel %vm252, %v229, %v371
        %v373 = vrot.slane %v230, 7
        %v374 = vsel %vm255, %v373, %v372
        %v375 = vrot.slane %v231, 6
        %v376 = vsel %vm258, %v375, %v374
        %v377 = vrot.slane %v232, 5
        %v378 = vsel %vm261, %v377, %v376
        %v379 = vrot.slane %v233, 4
        %v380 = vsel %vm264, %v379, %v378
        %v381 = vrot.slane %v234, 3
        %v382 = vsel %vm267, %v381, %v380
        %v383 = vrot.slane %v235, 2
        %v384 = vsel %vm270, %v383, %v382
        %386 = vmatprep.subr.mxu0 0.0
        %387 = vmatpush1.msra.mxu0 %v384
        %388 = vmatprep.subr.mxu0 0.0
        %389 = vmatpush1.msra.mxu0 0.0
        %390 = vmatprep.subr.mxu0 0.0
        %391 = vmatpush1.msra.mxu0 0.0
        %392 = vmatprep.subr.mxu0 0.0
        %393 = vmatpush1.msra.mxu0 0.0
        %394 = vmatprep.subr.mxu0 0.0
        %395 = vmatpush1.msra.mxu0 0.0
        %396 = vmatprep.subr.mxu0 0.0
        %397 = vmatpush1.msra.mxu0 0.0
        %398 = vmatprep.subr.mxu0 0.0
        %399 = vmatpush1.msra.mxu0 0.0
        %400 = vmatprep.subr.mxu0 0.0
        %401 = vmatpush1.msra.mxu0 0.0
        %402 = vmatprep.subr.mxu0 0.0
        %403 = vmatpush1.msra.mxu0 0.0
        %404 = vmatprep.subr.mxu0 0.0
        %405 = vmatpush1.msra.mxu0 0.0
        %406 = vmatprep.subr.mxu0 0.0
        %407 = vmatpush1.msra.mxu0 0.0
        %408 = vmatprep.subr.mxu0 0.0
        %409 = vmatpush1.msra.mxu0 0.0
        %410 = vmatprep.subr.mxu0 0.0
        %411 = vmatpush1.msra.mxu0 0.0
        %412 = vmatprep.subr.mxu0 0.0
        %413 = vmatpush1.msra.mxu0 0.0
        %414 = vmatprep.subr.mxu0 0.0
        %415 = vmatpush1.msra.mxu0 0.0
        %416 = vmatprep.subr.mxu0 0.0
        %417 = vmatpush1.msra.mxu0 0.0
        %418 = vmatprep.subr.mxu0 0.0
        %419 = vmatpush1.msra.mxu0 0.0
        %420 = vmatprep.subr.mxu0 0.0
        %421 = vmatpush1.msra.mxu0 0.0
        %422 = vmatprep.subr.mxu0 0.0
        %423 = vmatpush1.msra.mxu0 0.0
        %424 = vmatprep.subr.mxu0 0.0
        %425 = vmatpush1.msra.mxu0 0.0
        %426 = vmatprep.subr.mxu0 0.0
        %427 = vmatpush1.msra.mxu0 0.0
        %428 = vmatprep.subr.mxu0 0.0
        %429 = vmatpush1.msra.mxu0 0.0
        %430 = vmatprep.subr.mxu0 0.0
        %431 = vmatpush1.msra.mxu0 0.0
        %432 = vmatprep.subr.mxu0 0.0
        %433 = vmatpush1.msra.mxu0 0.0
        %434 = vmatprep.subr.mxu0 0.0
        %435 = vmatpush1.msra.mxu0 0.0
        %436 = vmatprep.subr.mxu0 0.0
        %437 = vmatpush1.msra.mxu0 0.0
        %438 = vmatprep.subr.mxu0 0.0
        %439 = vmatpush1.msra.mxu0 0.0
        %440 = vmatprep.subr.mxu0 0.0
        %441 = vmatpush1.msra.mxu0 0.0
        %442 = vmatprep.subr.mxu0 0.0
        %443 = vmatpush1.msra.mxu0 0.0
        %444 = vmatprep.subr.mxu0 0.0
        %445 = vmatpush1.msra.mxu0 0.0
        %446 = vmatprep.subr.mxu0 0.0
        %447 = vmatpush1.msra.mxu0 0.0
        %448 = vmatprep.subr.mxu0 0.0
        %449 = vmatpush1.msra.mxu0 0.0
        %450 = vmatprep.mubr.f32.mxu0 0.0
        %451 = vmatmul.mubr.f32.gmra.mrb[0].mxu0 %v275
        %v452 = vpop.f32.mrb[0].mxu0
        %v453 = vadd.f32 %v241, %v452
        %v454 = vpop.f32.mrb[0].mxu0
        %455 = vmatprep.mubr.f32.mxu0 0.0
        %456 = vmatmul.mubr.f32.gmra.mrb[0].mxu0 %v278
        %v457 = vpop.f32.mrb[0].mxu0
        %v458 = vadd.f32 %v241, %v457
        %v459 = vpop.f32.mrb[0].mxu0
        %460 = vmatprep.mubr.f32.mxu0 0.0
        %461 = vmatmul.mubr.f32.gmra.mrb[0].mxu0 %v281
        %v462 = vpop.f32.mrb[0].mxu0
        %v463 = vadd.f32 %v241, %v462
        %v464 = vpop.f32.mrb[0].mxu0
        %465 = vmatprep.mubr.f32.mxu0 0.0
        %466 = vmatmul.mubr.f32.gmra.mrb[0].mxu0 %v284
        %v467 = vpop.f32.mrb[0].mxu0
        %v468 = vadd.f32 %v241, %v467
        %v469 = vpop.f32.mrb[0].mxu0
        %470 = vdwg.mxu0
        %vm471 = vcmask 130048
        %472 = vst.msk [vmem:[%s221] sm:$0xff] %vm471, %v353
        %473 = vst.msk [vmem:[%s221 + $0x8] sm:$0xff] %vm471, %v453
        %474 = vst.msk [vmem:[%s221 + $0x10] sm:$0xff] %vm471, %v358
        %475 = vst.msk [vmem:[%s221 + $0x18] sm:$0xff] %vm471, %v458
        %476 = vst.msk [vmem:[%s221 + $0x20] sm:$0xff] %vm471, %v363
        %477 = vst.msk [vmem:[%s221 + $0x28] sm:$0xff] %vm471, %v463
        %478 = vst.msk [vmem:[%s221 + $0x30] sm:$0xff] %vm471, %v368
        %479 = vst.msk [vmem:[%s221 + $0x38] sm:$0xff] %vm471, %v468
        %s480 = sand.u32 %s113, 1
        %s481 = scalar_lea.sflag [#allocation4], %s480
        %s482 = sand.u32 %s113, 1
        %s483 = smul.addr %s482, 64
        %s484 = scalar_lea.vmem [#allocation7], %s483
        // Predicated region
        $region41: #{tpu_custom_call.1} parent=31 // pred_check
          %p485 = pneg %p123
        $region42: #{tpu_custom_call.1} parent=31 // pred_check_branch
          %487 = sbr.rel (%p485) target = $region44
        $region43: #{tpu_custom_call.1} parent=31 // pred_region
          %s488 = smul.u32 4, %s26
          %s490 = ssub.s32 1024, 1024
          %491 = vsyncadd %s481, %s490
          %s492 = smul.addr %s488, 2
          %s493 = smul.addr %s25, 16
          %s494 = sadd.s32 %s492, %s493
          %s495 = smul.addr %s494, 128
          %s496 = scalar_lea.hbm %s3, %s495
          %s497 = sshll.u32 %s484, 4
          %s498 = int_to_ptr.vmem [resolvable:$true] %s497
          %503 = dma.vmem_to_hbm [thread:$0]  %s498, 1024, %s496, %s481, 128, 128, 8
        $region44: #{tpu_custom_call.1} parent=31 // pred_fallthru
          _
      $region32: #{tpu_custom_call.1} parent=5 // pred_fallthru
        _
      %p504 = scmp.le.s32.totalorder 2, %s16
      // Predicated region
      $region45: #{tpu_custom_call.1} parent=5 // pred_check
        %p505 = pneg %p504
      $region46: #{tpu_custom_call.1} parent=5 // pred_check_branch
        %507 = sbr.rel (%p505) target = $region48
      $region47: #{tpu_custom_call.1} parent=5 // pred_region
        %s508 = ssub.s32 %s16, 2
        // Predicated region
        $region49: #{tpu_custom_call.1} parent=47 // pred_check
          %p509 = pneg %p129
        $region50: #{tpu_custom_call.1} parent=47 // pred_check_branch
          %511 = sbr.rel (%p509) target = $region52
        $region51: #{tpu_custom_call.1} parent=47 // pred_region
          %s512 = sand.u32 %s114, 1
          %s513 = scalar_lea.sflag [#allocation4], %s512
          %s514 = sand.u32 %s114, 1
          %s515 = smul.addr %s514, 64
          %s516 = scalar_lea.vmem [#allocation7], %s515
          %517 = dma.done %s513, 1024
        $region52: #{tpu_custom_call.1} parent=47 // pred_fallthru
          _
      $region48: #{tpu_custom_call.1} parent=5 // pred_fallthru
        _
    $region6: #{tpu_custom_call.1} parent=1 // loop_footer
      %s20 = sadd.s32 1, %s16
    $region7: #{tpu_custom_call.1} parent=1 // loop_footer_branch
      %15 = sbr.rel target = $region3
    $region8: #{tpu_custom_call.1} parent=1 // loop_exit
      _
    %518 = vsyncpa [#allocation3], 1
    %s519 = scalar_lea.sflag [#allocation3], 1
    %520 = vsyncpa %s519, 1
    %521 = vsyncpa [#allocation6], 1
    %522 = vsyncpa [#allocation4], 1
    %s523 = scalar_lea.sflag [#allocation4], 1
    %524 = vsyncpa %s523, 1

</llo_original>
